<compile_context>
chip_gen: v7x
topology: tpu7x:2x2x1
jax: 0.10.0
libtpu: 0.0.40
codegen_flags: <defaults>
</compile_context>

<pallas_src>
import functools

import jax
import jax.numpy as jnp
from jax.experimental import pallas as pl
from jax.experimental.pallas import tpu as pltpu


def _ordinal_kernel(x_ref, prob_ref, decode_ref, *, ord_num):
    # x_ref: (C, TILE) interleaved channel rows (batch dim squeezed by the
    # BlockSpec).  Even rows are softmax logit A, odd rows are logit B.
    a = x_ref[pl.ds(0, ord_num, 2), :].astype(jnp.float32)
    b = x_ref[pl.ds(1, ord_num, 2), :].astype(jnp.float32)
    a = jnp.clip(a, 1e-8, 1e8)
    b = jnp.clip(b, 1e-8, 1e8)
    # Second component of the 2-way softmax: exp(b)/(exp(a)+exp(b)) == sigmoid(b-a).
    prob_ref[0] = jax.nn.sigmoid(b - a).astype(prob_ref.dtype)
    # p > 0.5  <=>  b > a  (sigmoid monotone, sigmoid(0) = 0.5); integer
    # sublane reduction, independent of the EUP sigmoid result.
    decode_ref[0] = jnp.sum((b > a).astype(jnp.int32), axis=0, keepdims=True)


def ordinal_regression_layer(x, *, tile_hw=8192, vmem_budget_bytes=26 * 2**20):
    """DORN ordinal regression head.

    x: (N, C, H, W), C even.  Returns (decode_c, ord_c1):
      decode_c: (N, 1, H, W) int32
      ord_c1:   (N, C//2, H, W) x.dtype
    """
    N, C, H, W = x.shape
    assert C % 2 == 0 and C >= 2, "channel count must be even"
    ord_num = C // 2
    hw = H * W
    itemsize = jnp.dtype(x.dtype).itemsize

    # ---- lane-tile selection (no padding of x, no cropping of outputs) ----
    # tile is either a multiple of 128 (ragged last block masked by Pallas)
    # or the full hw extent.
    tile_cap = max(128, (int(tile_hw) // 128) * 128)
    # Double-buffered VMEM per lane: x block + prob block + decode block.
    bytes_per_lane = 2 * (C * itemsize + ord_num * itemsize + 4)
    tile_cap = min(tile_cap,
                   max(128, (vmem_budget_bytes // bytes_per_lane) // 128 * 128))

    hw128 = -(-hw // 128) * 128
    tile = min(tile_cap, hw128)
    # Keep several lane tiles at small batch so the "parallel" hw axis can be
    # split across TensorCores on v7x (single-TC v5e/v6e unaffected).
    min_tiles = 4 if N == 1 else (2 if N < 4 else 1)
    if hw128 // tile < min_tiles and hw128 >= min_tiles * 128:
        tile = -(-(hw128 // min_tiles) // 128) * 128
    if tile >= hw:
        tile = hw                      # single full-extent lane block
    num_t = -(-hw // tile)             # cdiv; last block may be ragged

    vmem_limit = int(min(96 * 2**20,
                         max(32 * 2**20, bytes_per_lane * tile + 4 * 2**20)))

    x3 = x.reshape(N, C, hw)           # free view of contiguous NCHW

    prob, decode = pl.pallas_call(
        functools.partial(_ordinal_kernel, ord_num=ord_num),
        out_shape=(
            jax.ShapeDtypeStruct((N, ord_num, hw), x.dtype),
            jax.ShapeDtypeStruct((N, 1, hw), jnp.int32),
        ),
        grid_spec=pltpu.PrefetchScalarGridSpec(
            num_scalar_prefetch=0,
            grid=(N, num_t),
            in_specs=[
                # One read of x per tile; even/odd split happens in VMEM.
                pl.BlockSpec((pl.Squeezed(), C, tile), lambda n, t: (n, 0, t)),
            ],
            out_specs=(
                pl.BlockSpec((1, ord_num, tile), lambda n, t: (n, 0, t)),
                pl.BlockSpec((1, 1, tile), lambda n, t: (n, 0, t)),
            ),
        ),
        compiler_params=pltpu.CompilerParams(
            dimension_semantics=("parallel", "parallel"),
            vmem_limit_bytes=vmem_limit,
        ),
    )(x3)

    # Free reshapes (last-dim split only, contiguous).
    ord_c1 = prob.reshape(N, ord_num, H, W)
    # TODO(synk): PyTorch sums bools to int64; int32 here (identical values
    # for ord_num < 2**31).
    decode_c = decode.reshape(N, 1, H, W)
    return decode_c, ord_c1


def _reference(x):
    N, C, H, W = x.shape
    ord_num = C // 2
    A = x[:, ::2, :, :].reshape(N, 1, ord_num * H * W)
    B = x[:, 1::2, :, :].reshape(N, 1, ord_num * H * W)
    Cc = jnp.clip(jnp.concatenate((A, B), axis=1), 1e-8, 1e8)
    ord_c = jax.nn.softmax(Cc, axis=1)
    ord_c1 = ord_c[:, 1, :].reshape(N, ord_num, H, W)
    decode_c = jnp.sum((ord_c1 > 0.5).astype(jnp.int32), axis=1).reshape(N, 1, H, W)
    return decode_c, ord_c1


def _check(x):
    decode_c, ord_c1 = ordinal_regression_layer(x)
    jax.block_until_ready((decode_c, ord_c1))
    ref_decode, ref_prob = _reference(x)
    N, C, H, W = x.shape
    assert ord_c1.shape == (N, C // 2, H, W)
    assert decode_c.shape == (N, 1, H, W)
    assert jnp.allclose(ord_c1, ref_prob, atol=1e-5, rtol=1e-5)
    assert jnp.array_equal(decode_c, ref_decode)


if __name__ == "__main__":
    key = jax.random.PRNGKey(0)
    k1, k2, k3 = jax.random.split(key, 3)

    # Lane-aligned, multi-tile case: ord_num = 4, H*W = 256 -> 2 lane tiles.
    x1 = jax.random.normal(k1, (2, 8, 16, 16), dtype=jnp.float32) * 3.0
    _check(x1)

    # Non-128-aligned spatial size, single full-extent lane block: H*W = 130.
    x2 = jax.random.normal(k2, (1, 6, 10, 13), dtype=jnp.float32) * 3.0
    _check(x2)

    # Ragged last lane block + N = 1 megacore-clamp path: H*W = 1221.
    x3 = jax.random.normal(k3, (1, 10, 33, 37), dtype=jnp.float32) * 3.0
    _check(x3)

    print("KERNEL_OK")
</pallas_src>

<mosaic_0001>
module attributes {stable_mosaic.version = 11 : i64} {
  func.func @_ordinal_kernel(%arg0: i32, %arg1: i32, %arg2: memref<1x8x128xf32, #tpu.memory_space<vmem>>, %arg3: memref<1x4x128xf32, #tpu.memory_space<vmem>>, %arg4: memref<1x1x128xi32, #tpu.memory_space<vmem>>) attributes {dimension_semantics = [#tpu.dimension_semantics<parallel>, #tpu.dimension_semantics<parallel>], iteration_bounds = array<i64: 2, 2>, scalar_prefetch = 0 : i64, scratch_operands = 0 : i64, tpu.core_type = #tpu.core_type<tc>, window_params = [{transform_indices = @transform_0, window_bounds = array<i64: 1, 8, 128>}, {transform_indices = @transform_1, window_bounds = array<i64: 1, 4, 128>}, {transform_indices = @transform_2, window_bounds = array<i64: 1, 1, 128>}]} {
    %c0 = arith.constant 0 : index
    %c0_0 = arith.constant 0 : index
    %c0_1 = arith.constant 0 : index
    %0 = tpu.strided_load %arg2[%c0, %c0_0, %c0_1] {strides = array<i32: 1, 2, 1>} : memref<1x8x128xf32, #tpu.memory_space<vmem>>, vector<1x4x128xf32>
    %1 = vector.shape_cast %0 : vector<1x4x128xf32> to vector<4x128xf32>
    %c0_2 = arith.constant 0 : index
    %c1 = arith.constant 1 : index
    %c0_3 = arith.constant 0 : index
    %2 = tpu.strided_load %arg2[%c0_2, %c1, %c0_3] {strides = array<i32: 1, 2, 1>} : memref<1x8x128xf32, #tpu.memory_space<vmem>>, vector<1x4x128xf32>
    %3 = vector.shape_cast %2 : vector<1x4x128xf32> to vector<4x128xf32>
    %cst = arith.constant 9.99999993E-9 : f32
    %cst_4 = arith.constant 1.000000e+08 : f32
    %4 = vector.broadcast %cst : f32 to vector<4x128xf32>
    %5 = arith.maximumf %4, %1 : vector<4x128xf32>
    %6 = vector.broadcast %cst_4 : f32 to vector<4x128xf32>
    %7 = arith.minimumf %6, %5 : vector<4x128xf32>
    %cst_5 = arith.constant 9.99999993E-9 : f32
    %cst_6 = arith.constant 1.000000e+08 : f32
    %8 = vector.broadcast %cst_5 : f32 to vector<4x128xf32>
    %9 = arith.maximumf %8, %3 : vector<4x128xf32>
    %10 = vector.broadcast %cst_6 : f32 to vector<4x128xf32>
    %11 = arith.minimumf %10, %9 : vector<4x128xf32>
    %12 = arith.subf %11, %7 : vector<4x128xf32>
    %13 = arith.negf %12 : vector<4x128xf32>
    %14 = math.exp %13 : vector<4x128xf32>
    %cst_7 = arith.constant 1.000000e+00 : f32
    %15 = vector.broadcast %cst_7 : f32 to vector<4x128xf32>
    %16 = arith.addf %15, %14 : vector<4x128xf32>
    %17 = arith.divf %15, %16 : vector<4x128xf32>
    %c0_8 = arith.constant 0 : index
    %c0_9 = arith.constant 0 : index
    %c0_10 = arith.constant 0 : index
    %18 = vector.load %arg3[%c0_8, %c0_9, %c0_10] : memref<1x4x128xf32, #tpu.memory_space<vmem>>, vector<1x4x128xf32>
    %19 = vector.shape_cast %18 : vector<1x4x128xf32> to vector<4x128xf32>
    %20 = vector.shape_cast %17 : vector<4x128xf32> to vector<1x4x128xf32>
    tpu.vector_store %arg3[%c0_8, %c0_9, %c0_10], %20 {strides = array<i32>} : memref<1x4x128xf32, #tpu.memory_space<vmem>>, vector<1x4x128xf32>,
    %21 = arith.cmpf ogt, %11, %7 : vector<4x128xf32>
    %22 = arith.extui %21 : vector<4x128xi1> to vector<4x128xi32>
    %cst_11 = arith.constant dense<0> : vector<128xi32>
    %23 = vector.multi_reduction <add>, %22, %cst_11 [0] : vector<4x128xi32> to vector<128xi32>
    %24 = vector.shape_cast %23 : vector<128xi32> to vector<1x128xi32>
    %c0_12 = arith.constant 0 : index
    %c0_13 = arith.constant 0 : index
    %c0_14 = arith.constant 0 : index
    %25 = vector.load %arg4[%c0_12, %c0_13, %c0_14] : memref<1x1x128xi32, #tpu.memory_space<vmem>>, vector<1x1x128xi32>
    %26 = vector.shape_cast %25 : vector<1x1x128xi32> to vector<1x128xi32>
    %27 = vector.shape_cast %24 : vector<1x128xi32> to vector<1x1x128xi32>
    tpu.vector_store %arg4[%c0_12, %c0_13, %c0_14], %27 {strides = array<i32>} : memref<1x1x128xi32, #tpu.memory_space<vmem>>, vector<1x1x128xi32>,
    return
  }
  func.func @transform_0(%arg0: i32, %arg1: i32) -> (i32, i32, i32) {
    %c0_i32 = arith.constant 0 : i32
    %c0_i32_0 = arith.constant 0 : i32
    return %arg0, %c0_i32, %arg1 : i32, i32, i32
  }
  func.func @transform_1(%arg0: i32, %arg1: i32) -> (i32, i32, i32) {
    %c0_i32 = arith.constant 0 : i32
    %c0_i32_0 = arith.constant 0 : i32
    return %arg0, %c0_i32, %arg1 : i32, i32, i32
  }
  func.func @transform_2(%arg0: i32, %arg1: i32) -> (i32, i32, i32) {
    %c0_i32 = arith.constant 0 : i32
    %c0_i32_0 = arith.constant 0 : i32
    return %arg0, %c0_i32, %arg1 : i32, i32, i32
  }
}

</mosaic_0001>

<llo_original>
// kernel: tpu_custom_call.1
$region0: #{tpu_custom_call.1}
  #allocation0 [shape = 'u32[]', space=smem, size = 0x4, offset = 0x4, fixed_abs, tag = 'smem constant byte address 0x4 - core index']
  #allocation1 [shape = 'u32[144,128]{1,0:T(1,128)}', space=vmem, size = 0x12000, scoped, tag = 'internal scratch']
  %s0 = inlined_call_operand.hbm [shape: f32[2,8,256], index: 0, kind: input, shape index: {}]
  %s1 = inlined_call_operand.hbm [shape: f32[2,4,256], index: 1, kind: output, shape index: {0}]
  %s2 = inlined_call_operand.hbm [shape: s32[2,1,256], index: 2, kind: output, shape index: {1}]
  %3 = xla_tuple %s1, %s2
  %s4 = sld [smem:[#allocation0]]
  $region49: #{tpu_custom_call.1} parent=0
    _
  %s6 = ssub.s32 1, %s4
  %s7 = scalar_select 0, %s6, %s4
  $region1: #{tpu_custom_call.1} parent=0
    #allocation2 [shape = 'u8[8192]{0}', space=vmem, size = 0x2000, scoped, tag = 'input window, operand 0']
    #allocation3 [shape = 's32[2]{0}', space=sflag, size = 0x8, scoped, tag = 'scoped memory for tpu_custom_call.1']
    #allocation4 [shape = 's32[2]{0}', space=sflag, size = 0x8, scoped, tag = 'scoped memory for tpu_custom_call.1']
    #allocation5 [shape = 'u8[4096]{0}', space=vmem, size = 0x1000, scoped, tag = 'output window, operand 0']
    #allocation6 [shape = 'u8[1024]{0}', space=vmem, size = 0x400, scoped, tag = 'output window, operand 1']
    #allocation7 [shape = 's32[2]{0}', space=sflag, size = 0x8, scoped, tag = 'scoped memory for tpu_custom_call.1']
    %8 = vsyncpa [#allocation3], 0
    %s9 = scalar_lea.sflag [#allocation3], 1
    %10 = vsyncpa %s9, 0
    %11 = vsyncpa [#allocation4], 0
    %s12 = scalar_lea.sflag [#allocation4], 1
    %13 = vsyncpa %s12, 0
    %14 = vsyncpa [#allocation7], 0
    %s15 = scalar_lea.sflag [#allocation7], 1
    %16 = vsyncpa %s15, 0
    loop: start=0, step=1, limit=6
    $region2: #{tpu_custom_call.1} parent=1 // loop_pre_header
      _
    $region3: #{tpu_custom_call.1} parent=1 // loop_header
      %s18 = sphi 0, %s22
      %p19 = scmp.ge.s32.totalorder %s18, 6
      %s25 = sphi 0, %s37
      %s26 = sphi 0, %s33
      %s27 = sphi 0, %s25
      %s28 = sphi 0, %s26
      %s29 = sphi 0, %s27
      %s30 = sphi 0, %s28
      %s42 = sphi 0, %s44
      %s45 = sphi 0, %s42
      %s46 = sphi 0, %s45
      %s62 = sphi 0, %s46
      %s70 = sphi 0, %s72
      %s73 = sphi 0, %s70
      %s74 = sphi 0, %s73
      %s90 = sphi 0, %s74
      %s98 = sphi 0, %s100
      %s101 = sphi 0, %s98
      %s102 = sphi 0, %s101
      %s118 = sphi 0, %s102
    $region4: #{tpu_custom_call.1} parent=1 // loop_header_branch
      %21 = sbr.rel (%p19) target = $region8
    $region5: #{tpu_custom_call.1} parent=1 // loop_body
      %s23 = ssub.s32 %s18, 1
      %s24 = ssub.s32 %s18, 2
      %s31 = sadd.s32 1, %s26
      %p32 = scmp.ge.s32.totalorder %s31, 2
      %s33 = scalar_select %p32, 0, %s31
      %s34 = sadd.s32 1, %s25
      %s35 = scalar_select %p32, %s34, %s25
      %p36 = scmp.ge.s32.totalorder %s35, 2
      %s37 = scalar_select %p36, 0, %s35
      %s38 = ssub.s32 %s25, %s37
      %s39 = ssub.s32 %s26, %s33
      %s40 = sor.u32 %s38, %s39
      %p41 = scmp.eq.s32.totalorder %s40, 0
      %s43 = sadd.s32 %s42, 1
      %s44 = scalar_select %p41, %s42, %s43
      %p47 = pneg %p41
      %p48 = scmp.eq.s32.totalorder %s18, 3
      %p49 = por %p47, %p48
      %p50 = scmp.ne.s32.totalorder %s42, %s45
      %p51 = scmp.eq.s32.totalorder %s18, 0
      %p52 = por %p50, %p51
      %p53 = scmp.ne.s32.totalorder %s42, %s45
      %p54 = scmp.eq.s32.totalorder %s23, 3
      %p55 = por %p53, %p54
      %p56 = scmp.ne.s32.totalorder %s45, %s46
      %p57 = scmp.eq.s32.totalorder %s23, 0
      %p58 = por %p56, %p57
      %p59 = scmp.ne.s32.totalorder %s45, %s46
      %p60 = scmp.eq.s32.totalorder %s24, 3
      %p61 = por %p59, %p60
      %p63 = scmp.ne.s32.totalorder %s46, %s62
      %p64 = scmp.eq.s32.totalorder %s24, 0
      %p65 = por %p63, %p64
      %s66 = ssub.s32 %s25, %s37
      %s67 = ssub.s32 %s26, %s33
      %s68 = sor.u32 %s66, %s67
      %p69 = scmp.eq.s32.totalorder %s68, 0
      %s71 = sadd.s32 %s70, 1
      %s72 = scalar_select %p69, %s70, %s71
      %p75 = pneg %p69
      %p76 = scmp.eq.s32.totalorder %s18, 3
      %p77 = por %p75, %p76
      %p78 = scmp.ne.s32.totalorder %s70, %s73
      %p79 = scmp.eq.s32.totalorder %s18, 0
      %p80 = por %p78, %p79
      %p81 = scmp.ne.s32.totalorder %s70, %s73
      %p82 = scmp.eq.s32.totalorder %s23, 3
      %p83 = por %p81, %p82
      %p84 = scmp.ne.s32.totalorder %s73, %s74
      %p85 = scmp.eq.s32.totalorder %s23, 0
      %p86 = por %p84, %p85
      %p87 = scmp.ne.s32.totalorder %s73, %s74
      %p88 = scmp.eq.s32.totalorder %s24, 3
      %p89 = por %p87, %p88
      %p91 = scmp.ne.s32.totalorder %s74, %s90
      %p92 = scmp.eq.s32.totalorder %s24, 0
      %p93 = por %p91, %p92
      %s94 = ssub.s32 %s25, %s37
      %s95 = ssub.s32 %s26, %s33
      %s96 = sor.u32 %s94, %s95
      %p97 = scmp.eq.s32.totalorder %s96, 0
      %s99 = sadd.s32 %s98, 1
      %s100 = scalar_select %p97, %s98, %s99
      %p103 = pneg %p97
      %p104 = scmp.eq.s32.totalorder %s18, 3
      %p105 = por %p103, %p104
      %p106 = scmp.ne.s32.totalorder %s98, %s101
      %p107 = scmp.eq.s32.totalorder %s18, 0
      %p108 = por %p106, %p107
      %p109 = scmp.ne.s32.totalorder %s98, %s101
      %p110 = scmp.eq.s32.totalorder %s23, 3
      %p111 = por %p109, %p110
      %p112 = scmp.ne.s32.totalorder %s101, %s102
      %p113 = scmp.eq.s32.totalorder %s23, 0
      %p114 = por %p112, %p113
      %p115 = scmp.ne.s32.totalorder %s101, %s102
      %p116 = scmp.eq.s32.totalorder %s24, 3
      %p117 = por %p115, %p116
      %p119 = scmp.ne.s32.totalorder %s102, %s118
      %p120 = scmp.eq.s32.totalorder %s24, 0
      %p121 = por %p119, %p120
      %p122 = scmp.le.s32.totalorder 1, %s18
      %p123 = scmp.lt.s32.totalorder %s18, 5
      %p124 = pnand %p122, %p123
      %p125 = pneg %p124
      // Predicated region
      $region9: #{tpu_custom_call.1} parent=5 // pred_check
        _
      $region10: #{tpu_custom_call.1} parent=5 // pred_check_branch
        %127 = sbr.rel (%p124) target = $region12
      $region11: #{tpu_custom_call.1} parent=5 // pred_region
        %s128 = ssub.s32 %s18, 1
      $region12: #{tpu_custom_call.1} parent=5 // pred_fallthru
        _
      %p129 = scmp.lt.s32.totalorder %s18, 4
      // Predicated region
      $region13: #{tpu_custom_call.1} parent=5 // pred_check
        %p130 = pneg %p129
      $region14: #{tpu_custom_call.1} parent=5 // pred_check_branch
        %132 = sbr.rel (%p130) target = $region16
      $region15: #{tpu_custom_call.1} parent=5 // pred_region
        // Predicated region
        $region17: #{tpu_custom_call.1} parent=15 // pred_check
          %p133 = pneg %p52
        $region18: #{tpu_custom_call.1} parent=15 // pred_check_branch
          %135 = sbr.rel (%p133) target = $region20
        $region19: #{tpu_custom_call.1} parent=15 // pred_region
          %s136 = sand.u32 %s42, 1
          %s137 = scalar_lea.sflag [#allocation3], %s136
          %s138 = sand.u32 %s42, 1
          %s139 = smul.addr %s138, 8
          %s140 = scalar_lea.vmem [#allocation2], %s139
          %s142 = ssub.s32 128, 128
          %143 = vsyncadd %s137, %s142
          %s144 = smul.addr %s25, 2
          %s145 = sadd.s32 %s26, %s144
          %s146 = smul.addr %s145, 128
          %s147 = scalar_lea.hbm %s0, %s146
          %s149 = sshll.u32 %s140, 4
          %s150 = int_to_ptr.vmem [resolvable:$true] %s149
          %152 = dma.hbm_to_vmem [thread:$0]  %s147, 128, %s150, %s137
        $region20: #{tpu_custom_call.1} parent=15 // pred_fallthru
          _
      $region16: #{tpu_custom_call.1} parent=5 // pred_fallthru
        _
      %p153 = scmp.le.s32.totalorder 1, %s18
      %p154 = scmp.lt.s32.totalorder %s18, 5
      %p155 = pnand %p153, %p154
      %p156 = pneg %p155
      // Predicated region
      $region21: #{tpu_custom_call.1} parent=5 // pred_check
        _
      $region22: #{tpu_custom_call.1} parent=5 // pred_check_branch
        %158 = sbr.rel (%p155) target = $region24
      $region23: #{tpu_custom_call.1} parent=5 // pred_region
        %s159 = ssub.s32 %s18, 1
        %s160 = sand.u32 %s45, 1
        %s161 = scalar_lea.sflag [#allocation3], %s160
        %s162 = sand.u32 %s45, 1
        %s163 = smul.addr %s162, 8
        %s164 = scalar_lea.vmem [#allocation2], %s163
        // Predicated region
        $region25: #{tpu_custom_call.1} parent=23 // pred_check
          %p165 = pneg %p58
        $region26: #{tpu_custom_call.1} parent=23 // pred_check_branch
          %167 = sbr.rel (%p165) target = $region28
        $region27: #{tpu_custom_call.1} parent=23 // pred_region
          %168 = dma.done %s161, 128
        $region28: #{tpu_custom_call.1} parent=23 // pred_fallthru
          _
        %s169 = sand.u32 %s45, 1
        %s170 = scalar_lea.sflag [#allocation3], %s169
        %s171 = sand.u32 %s45, 1
        %s172 = smul.addr %s171, 8
        %s173 = scalar_lea.vmem [#allocation2], %s172
        %p174 = pneg %p58
        %p175 = pneg %p55
        %p176 = pneg %p86
        %p177 = pneg %p83
        %s178 = sand.u32 %s73, 1
        %s179 = scalar_lea.sflag [#allocation4], %s178
        %s180 = sand.u32 %s73, 1
        %s181 = smul.addr %s180, 4
        %s182 = scalar_lea.vmem [#allocation5], %s181
        %p183 = pneg %p114
        %p184 = pneg %p111
        %s185 = sand.u32 %s101, 1
        %s186 = scalar_lea.sflag [#allocation7], %s185
        %s187 = sand.u32 %s101, 1
        %s188 = scalar_lea.vmem [#allocation6], %s187
        %v189 = vld [vmem:[%s164] ss:$2 sm:$0xf]
        %s190 = scalar_lea.vmem %s164, 1 [#allocation2]
        %v191 = vld [vmem:[%s190] ss:$2 sm:$0xf]
        %v192 = vmax.f32 %v189, 1e-08
        %v193 = vmin.f32 %v192, 1e+08
        %v194 = vmax.f32 %v191, 1e-08
        %v195 = vmin.f32 %v194, 1e+08
        %v196 = vsub.f32 %v195, %v193
        %v197 = vxor.u32 %v196, 2147483648
        %v198 = vmul.f32 %v197, 1.442695
        %v199 = vpow.pop %v198
        %v200 = vadd.f32 %v199, 1.0
        %v201 = vrcp.pop %v200
        %v202 = vmul.f32 1.0, %v201
        %203 = vst [vmem:[%s182] sm:$0xf] %v202
        %vm204 = vcmp.gt.f32.partialorder %v195, %v193
        %v205 = vsel %vm204, 1, 0
        %vm206 = vcmask 1043456
        %v207 = vsel %vm206, %v205, 0
        %v208 = vrot.slane %v207, 4
        %v209 = vadd.s32 %v207, %v208
        %v210 = vrot.slane %v209, 2
        %v211 = vadd.s32 %v209, %v210
        %v212 = vrot.slane %v211, 1
        %v213 = vadd.s32 %v211, %v212
        %214 = vst [vmem:[%s188] sm:$0x1] %v213
        %s215 = sand.u32 %s73, 1
        %s216 = scalar_lea.sflag [#allocation4], %s215
        %s217 = sand.u32 %s73, 1
        %s218 = smul.addr %s217, 4
        %s219 = scalar_lea.vmem [#allocation5], %s218
        %s220 = sand.u32 %s101, 1
        %s221 = scalar_lea.sflag [#allocation7], %s220
        %s222 = sand.u32 %s101, 1
        %s223 = scalar_lea.vmem [#allocation6], %s222
        // Predicated region
        $region29: #{tpu_custom_call.1} parent=23 // pred_check
          %p224 = pneg %p83
        $region30: #{tpu_custom_call.1} parent=23 // pred_check_branch
          %226 = sbr.rel (%p224) target = $region32
        $region31: #{tpu_custom_call.1} parent=23 // pred_region
          %s228 = ssub.s32 64, 64
          %229 = vsyncadd %s216, %s228
          %s230 = smul.addr %s27, 2
          %s231 = sadd.s32 %s28, %s230
          %s232 = smul.addr %s231, 64
          %s233 = scalar_lea.hbm %s1, %s232
          %s235 = sshll.u32 %s219, 4
          %s236 = int_to_ptr.vmem [resolvable:$true] %s235
          %238 = dma.vmem_to_hbm [thread:$0]  %s236, 64, %s233, %s216
        $region32: #{tpu_custom_call.1} parent=23 // pred_fallthru
          _
        // Predicated region
        $region33: #{tpu_custom_call.1} parent=23 // pred_check
          %p239 = pneg %p111
        $region34: #{tpu_custom_call.1} parent=23 // pred_check_branch
          %241 = sbr.rel (%p239) target = $region36
        $region35: #{tpu_custom_call.1} parent=23 // pred_region
          %s243 = ssub.s32 16, 16
          %244 = vsyncadd %s221, %s243
          %s245 = smul.addr %s27, 2
          %s246 = sadd.s32 %s28, %s245
          %s247 = smul.addr %s246, 16
          %s248 = scalar_lea.hbm %s2, %s247
          %s250 = sshll.u32 %s223, 4
          %s251 = int_to_ptr.vmem [resolvable:$true] %s250
          %253 = dma.vmem_to_hbm [thread:$0]  %s251, 16, %s248, %s221
        $region36: #{tpu_custom_call.1} parent=23 // pred_fallthru
          _
      $region24: #{tpu_custom_call.1} parent=5 // pred_fallthru
        _
      %p254 = scmp.le.s32.totalorder 2, %s18
      // Predicated region
      $region37: #{tpu_custom_call.1} parent=5 // pred_check
        %p255 = pneg %p254
      $region38: #{tpu_custom_call.1} parent=5 // pred_check_branch
        %257 = sbr.rel (%p255) target = $region40
      $region39: #{tpu_custom_call.1} parent=5 // pred_region
        %s258 = ssub.s32 %s18, 2
        // Predicated region
        $region41: #{tpu_custom_call.1} parent=39 // pred_check
          %p259 = pneg %p89
        $region42: #{tpu_custom_call.1} parent=39 // pred_check_branch
          %261 = sbr.rel (%p259) target = $region44
        $region43: #{tpu_custom_call.1} parent=39 // pred_region
          %s262 = sand.u32 %s74, 1
          %s263 = scalar_lea.sflag [#allocation4], %s262
          %s264 = sand.u32 %s74, 1
          %s265 = smul.addr %s264, 4
          %s266 = scalar_lea.vmem [#allocation5], %s265
          %267 = dma.done %s263, 64
        $region44: #{tpu_custom_call.1} parent=39 // pred_fallthru
          _
        // Predicated region
        $region45: #{tpu_custom_call.1} parent=39 // pred_check
          %p268 = pneg %p117
        $region46: #{tpu_custom_call.1} parent=39 // pred_check_branch
          %270 = sbr.rel (%p268) target = $region48
        $region47: #{tpu_custom_call.1} parent=39 // pred_region
          %s271 = sand.u32 %s102, 1
          %s272 = scalar_lea.sflag [#allocation7], %s271
          %s273 = sand.u32 %s102, 1
          %s274 = scalar_lea.vmem [#allocation6], %s273
          %275 = dma.done %s272, 16
        $region48: #{tpu_custom_call.1} parent=39 // pred_fallthru
          _
      $region40: #{tpu_custom_call.1} parent=5 // pred_fallthru
        _
    $region6: #{tpu_custom_call.1} parent=1 // loop_footer
      %s22 = sadd.s32 1, %s18
    $region7: #{tpu_custom_call.1} parent=1 // loop_footer_branch
      %17 = sbr.rel target = $region3
    $region8: #{tpu_custom_call.1} parent=1 // loop_exit
      _
    %276 = vsyncpa [#allocation3], 1
    %s277 = scalar_lea.sflag [#allocation3], 1
    %278 = vsyncpa %s277, 1
    %279 = vsyncpa [#allocation4], 1
    %s280 = scalar_lea.sflag [#allocation4], 1
    %281 = vsyncpa %s280, 1
    %282 = vsyncpa [#allocation7], 1
    %s283 = scalar_lea.sflag [#allocation7], 1
    %284 = vsyncpa %s283, 1

</llo_original>
